<compile_context>
chip_gen: v5e
topology: v5e:2x2
jax: 0.10.0
libtpu: 0.0.40
codegen_flags: <defaults>
</compile_context>

<pallas_src>
import functools

import jax
import jax.numpy as jnp
from jax.experimental import pallas as pl
from jax.experimental.pallas import tpu as pltpu

_LANE = 128
_BASE_SUBLANE = 8
_MAX_TILE_HW = 8192      # lanes per block when the reduce axis must be tiled
_MAX_TILE_NC = 2048      # keeps lane-padded (tile_nc, 1) outputs/scratch small
_FASTPATH_HW = 256       # below this HW the op is overhead dominated
_FASTPATH_BYTES = 2 * 1024 * 1024

_POOL_TYPES = ("avg", "max", "avgmax", "catavgmax")


def _cdiv(a, b):
    return -(-a // b)


def _round_up(x, m):
    return _cdiv(x, m) * m


def _tpu_params():
    """(per_buffer_bytes, vmem_limit_bytes, split_rows) per TPU generation."""
    try:
        kind = jax.devices()[0].device_kind.lower().replace(" ", "")
    except Exception:
        kind = ""
    is_v7 = ("v7" in kind) or ("tpu7" in kind) or ("7x" in kind)
    multi_tc = is_v7 or ("v4" in kind) or ("v5p" in kind) or ("v6p" in kind)
    if is_v7:
        # 64 MiB VMEM / TC, ~3.2 TB/s HBM: 12 MiB streamed tiles hide the
        # ~0.35 us per-grid-step overhead; 48 MiB scoped limit stays well
        # under the 64 MiB physical VMEM (2x12 MiB input bufs + tiny scratch).
        return 12 * 1024 * 1024, 48 * 1024 * 1024, True
    # v5e / v6e (and unknown): 6 MiB double-buffered tiles already hide the
    # per-step overhead at <= 1.4 TB/s; 32 MiB scoped limit is safe everywhere
    # (128 MiB physical) and gives headroom over v5e's 16 MiB default.
    return 6 * 1024 * 1024, 32 * 1024 * 1024, multi_tc


def _choose_tiles(nc, hw, dtype_bytes, per_buffer_bytes, split_rows):
    """Pick (tile_nc, tile_hw) against the per-generation VMEM budget."""
    # Sub-32-bit dtypes pack along sublanes: 8 for f32, 16 for bf16, 32 int8.
    sublane = max(_BASE_SUBLANE, 32 // max(1, dtype_bytes))
    if hw <= _MAX_TILE_HW:
        tile_hw = hw                       # full reduce axis in one block
        hw_padded = _round_up(hw, _LANE)   # lane padding for the VMEM budget
    else:
        # Balanced tiling: HW = 9216 -> 2 x 4608, no ragged 8192+1024 tail.
        n_blocks = _cdiv(hw, _MAX_TILE_HW)
        tile_hw = _round_up(_cdiv(hw, n_blocks), _LANE)
        hw_padded = tile_hw
    rows = per_buffer_bytes // max(1, hw_padded * dtype_bytes)
    rows = max(sublane, min(rows, _MAX_TILE_NC))
    if split_rows and nc >= 2 * sublane:
        # Guarantee >= 2 row blocks so the "parallel" grid axis shards across
        # both TensorCores on 2-TC chips (v7x / v4p / v5p).
        rows = min(rows, _round_up(_cdiv(nc, 2), sublane))
    if rows >= nc:
        tile_nc = nc                       # full-dim block: always legal
    else:
        tile_nc = max(sublane, (rows // sublane) * sublane)
    return tile_nc, tile_hw


def _mask_fill_value(dtype):
    dtype = jnp.dtype(dtype)
    if jnp.issubdtype(dtype, jnp.floating):
        return float("-inf")
    # TODO(synk): integer 'avg' outputs are truncated on the final cast; the
    # PyTorch module only targets float feature maps, so ints are best-effort.
    return int(jnp.iinfo(dtype).min)


def _global_pool_kernel(x_ref, *refs, pool_type, hw_total, tile_hw, tail_len):
    """grid = (row blocks, hw blocks); accumulate over hw blocks in f32."""
    need_avg = pool_type in ("avg", "avgmax", "catavgmax")
    need_max = pool_type in ("max", "avgmax", "catavgmax")
    n_out = 2 if pool_type == "catavgmax" else 1
    out_refs, scratch_refs = refs[:n_out], refs[n_out:]

    idx = 0
    sum_ref = max_ref = None
    if need_avg:
        sum_ref = scratch_refs[idx]
        idx += 1
    if need_max:
        max_ref = scratch_refs[idx]

    k = pl.program_id(1)
    nk = pl.num_programs(1)

    @pl.when(k == 0)
    def _init():
        if need_avg:
            sum_ref[...] = jnp.zeros_like(sum_ref)
        if need_max:
            max_ref[...] = jnp.full_like(max_ref, -jnp.inf)

    x = x_ref[...]

    def _accumulate(masked):
        if masked:
            # (1, tile_hw) mask broadcast over rows; only traced for the
            # last hw block, so non-tail steps stay unmasked full-width.
            valid = (jax.lax.broadcasted_iota(jnp.int32, (1, tile_hw), 1)
                     < tail_len)
        if need_avg:
            xs = jnp.where(valid, x, 0) if masked else x
            sum_ref[...] += jnp.sum(xs, axis=-1, keepdims=True,
                                    dtype=jnp.float32)
        if need_max:
            xm = (jnp.where(valid, x, _mask_fill_value(x.dtype))
                  if masked else x)
            max_ref[...] = jnp.maximum(
                max_ref[...],
                jnp.max(xm, axis=-1, keepdims=True).astype(jnp.float32))

    if tail_len is None:        # HW divides evenly: never mask
        _accumulate(masked=False)
    else:                       # mask ONLY the ragged last hw block
        @pl.when(k < nk - 1)
        def _body():
            _accumulate(masked=False)

        @pl.when(k == nk - 1)
        def _tail():
            _accumulate(masked=True)

    @pl.when(k == nk - 1)
    def _finalize():
        inv_hw = jnp.float32(1.0 / float(hw_total))
        if pool_type == "avg":
            out_refs[0][...] = (sum_ref[...] * inv_hw).astype(out_refs[0].dtype)
        elif pool_type == "max":
            out_refs[0][...] = max_ref[...].astype(out_refs[0].dtype)
        elif pool_type == "avgmax":
            out = 0.5 * (sum_ref[...] * inv_hw + max_ref[...])
            out_refs[0][...] = out.astype(out_refs[0].dtype)
        else:  # catavgmax: two separate outputs, no in-kernel lane concat
            out_refs[0][...] = (sum_ref[...] * inv_hw).astype(out_refs[0].dtype)
            out_refs[1][...] = max_ref[...].astype(out_refs[1].dtype)


def _reference_pool(x, pool_type):
    x_avg = jnp.mean(x, axis=(2, 3), keepdims=True)
    x_max = jnp.max(x, axis=(2, 3), keepdims=True)
    if pool_type == "avg":
        return x_avg
    if pool_type == "max":
        return x_max
    if pool_type == "avgmax":
        return 0.5 * (x_avg + x_max)
    return jnp.concatenate((x_avg, x_max), axis=1)


def global_pool2d_pallas(x, pool_type, *, force_pallas=False):
    """Pallas equivalent of GlobalPool2d(pool_type)(x) for NCHW input."""
    if pool_type not in _POOL_TYPES:
        raise ValueError(f"Invalid pool type: {pool_type}")

    N, C, H, W = x.shape
    NC, HW = N * C, H * W
    dtype_bytes = jnp.dtype(x.dtype).itemsize

    # Small-input fast path: canonical global-pool maps (7x7, 14x14, tiny
    # tensors) are launch/pipeline-overhead dominated in a custom kernel;
    # XLA's fused reduce is near roofline there.
    if not force_pallas and (HW < _FASTPATH_HW
                             or NC * HW * dtype_bytes < _FASTPATH_BYTES):
        return _reference_pool(x, pool_type)

    per_buffer_bytes, vmem_limit, split_rows = _tpu_params()
    tile_nc, tile_hw = _choose_tiles(NC, HW, dtype_bytes, per_buffer_bytes,
                                     split_rows)
    grid = (_cdiv(NC, tile_nc), _cdiv(HW, tile_hw))
    rem = HW - (grid[1] - 1) * tile_hw
    tail_len = None if rem == tile_hw else rem   # static valid-lane count

    x2d = x.reshape(NC, HW)

    need_avg = pool_type in ("avg", "avgmax", "catavgmax")
    need_max = pool_type in ("max", "avgmax", "catavgmax")
    scratch_shapes = []
    if need_avg:
        scratch_shapes.append(pltpu.VMEM((tile_nc, 1), jnp.float32))
    if need_max:
        scratch_shapes.append(pltpu.VMEM((tile_nc, 1), jnp.float32))

    out_spec = pl.BlockSpec((tile_nc, 1), lambda i, k: (i, 0))
    out_shape = jax.ShapeDtypeStruct((NC, 1), x.dtype)
    if pool_type == "catavgmax":
        out_specs = (out_spec, out_spec)
        out_shapes = (out_shape, out_shape)
    else:
        out_specs = out_spec
        out_shapes = out_shape

    kernel = functools.partial(
        _global_pool_kernel, pool_type=pool_type, hw_total=HW,
        tile_hw=tile_hw, tail_len=tail_len)

    result = pl.pallas_call(
        kernel,
        grid=grid,
        in_specs=[pl.BlockSpec((tile_nc, tile_hw), lambda i, k: (i, k))],
        out_specs=out_specs,
        out_shape=out_shapes,
        scratch_shapes=scratch_shapes,
        compiler_params=pltpu.CompilerParams(
            dimension_semantics=("parallel", "arbitrary"),
            vmem_limit_bytes=vmem_limit),
    )(x2d)

    if pool_type == "catavgmax":
        avg, mx = result
        # torch.cat((x_avg, x_max), dim=1) -> (N, 2C, 1, 1)
        return jnp.concatenate(
            (avg.reshape(N, C, 1, 1), mx.reshape(N, C, 1, 1)), axis=1)
    return result.reshape(N, C, 1, 1)


class GlobalPool2d:
    """JAX/Pallas mirror of the PyTorch GlobalPool2d module (no parameters)."""

    def __init__(self, pool_type):
        if pool_type not in _POOL_TYPES:
            raise ValueError(f"Invalid pool type: {pool_type}")
        self.pool_type = pool_type

    def __call__(self, x):
        return global_pool2d_pallas(x, self.pool_type)

    def feat_mult(self):
        return 2 if self.pool_type == "catavgmax" else 1


if __name__ == "__main__":
    key = jax.random.PRNGKey(0)
    k0, k1, k2 = jax.random.split(key, 3)
    # Primary small spec-consistent input, plus shapes that exercise the
    # balanced-tiled reduce axis (HW = 9216 -> 2x4608, no mask) and the
    # ragged-tail masked path (HW = 9025).
    cases = [
        jax.random.normal(k0, (2, 4, 16, 16), dtype=jnp.float32),
        jax.random.normal(k1, (1, 4, 96, 96), dtype=jnp.float32),
        jax.random.normal(k2, (2, 16, 95, 95), dtype=jnp.float32),
    ]

    ok = True
    for x in cases:
        for pool_type in _POOL_TYPES:
            mod = GlobalPool2d(pool_type)
            ref = _reference_pool(x, pool_type)
            expected_c = x.shape[1] * mod.feat_mult()
            # Pallas kernel path (forced so the small test shapes don't take
            # the XLA fast path) ...
            out_k = jax.block_until_ready(
                global_pool2d_pallas(x, pool_type, force_pallas=True))
            # ... and the default module path (may use the fast path).
            out_m = jax.block_until_ready(mod(x))
            for name, out in (("pallas", out_k), ("module", out_m)):
                if out.shape != (x.shape[0], expected_c, 1, 1):
                    ok = False
                    print(f"BAD SHAPE [{name}] {pool_type} {x.shape}: "
                          f"{out.shape}")
                elif not jnp.allclose(out, ref, atol=1e-5, rtol=1e-5):
                    ok = False
                    print(f"MISMATCH [{name}] {pool_type} shape={x.shape}")

    if ok:
        print("KERNEL_OK")
</pallas_src>

<mosaic_0001>
module attributes {stable_mosaic.version = 11 : i64} {
  func.func @_global_pool_kernel(%arg0: i32, %arg1: i32, %arg2: memref<8x256xf32, #tpu.memory_space<vmem>>, %arg3: memref<8x1xf32, #tpu.memory_space<vmem>>, %arg4: memref<8x1xf32, #tpu.memory_space<vmem>>) attributes {dimension_semantics = [#tpu.dimension_semantics<parallel>, #tpu.dimension_semantics<arbitrary>], iteration_bounds = array<i64: 1, 1>, scalar_prefetch = 0 : i64, scratch_operands = 1 : i64, tpu.core_type = #tpu.core_type<tc>, window_params = [{transform_indices = @transform_0, window_bounds = array<i64: 8, 256>}, {transform_indices = @transform_1, window_bounds = array<i64: 8, 1>}]} {
    %c0_i32 = arith.constant 0 : i32
    %0 = arith.cmpi eq, %arg1, %c0_i32 : i32
    %1 = arith.extui %0 : i1 to i32
    %c0_i32_0 = arith.constant 0 : i32
    %2 = arith.cmpi ne, %1, %c0_i32_0 : i32
    scf.if %2 {
      %cst_8 = arith.constant 0.000000e+00 : f32
      %12 = vector.broadcast %cst_8 : f32 to vector<8x1xf32>
      %c0_9 = arith.constant 0 : index
      %c0_10 = arith.constant 0 : index
      %13 = vector.load %arg4[%c0_9, %c0_10] : memref<8x1xf32, #tpu.memory_space<vmem>>, vector<8x1xf32>
      tpu.vector_store %arg4[%c0_9, %c0_10], %12 {strides = array<i32>} : memref<8x1xf32, #tpu.memory_space<vmem>>, vector<8x1xf32>,
    } else {
    }
    %c0 = arith.constant 0 : index
    %c0_1 = arith.constant 0 : index
    %3 = vector.load %arg2[%c0, %c0_1] : memref<8x256xf32, #tpu.memory_space<vmem>>, vector<8x256xf32>
    %c0_2 = arith.constant 0 : index
    %c0_3 = arith.constant 0 : index
    %4 = vector.load %arg4[%c0_2, %c0_3] : memref<8x1xf32, #tpu.memory_space<vmem>>, vector<8x1xf32>
    %cst = arith.constant dense<0.000000e+00> : vector<8xf32>
    %5 = vector.multi_reduction <add>, %3, %cst [1] : vector<8x256xf32> to vector<8xf32>
    %6 = vector.shape_cast %5 : vector<8xf32> to vector<8x1xf32>
    %7 = arith.addf %4, %6 : vector<8x1xf32>
    %c0_4 = arith.constant 0 : index
    %c0_5 = arith.constant 0 : index
    %8 = vector.load %arg4[%c0_4, %c0_5] : memref<8x1xf32, #tpu.memory_space<vmem>>, vector<8x1xf32>
    tpu.vector_store %arg4[%c0_4, %c0_5], %7 {strides = array<i32>} : memref<8x1xf32, #tpu.memory_space<vmem>>, vector<8x1xf32>,
    %c0_i32_6 = arith.constant 0 : i32
    %9 = arith.cmpi eq, %arg1, %c0_i32_6 : i32
    %10 = arith.extui %9 : i1 to i32
    %c0_i32_7 = arith.constant 0 : i32
    %11 = arith.cmpi ne, %10, %c0_i32_7 : i32
    scf.if %11 {
      %c0_8 = arith.constant 0 : index
      %c0_9 = arith.constant 0 : index
      %12 = vector.load %arg4[%c0_8, %c0_9] : memref<8x1xf32, #tpu.memory_space<vmem>>, vector<8x1xf32>
      %cst_10 = arith.constant 3.906250e-03 : f32
      %13 = vector.broadcast %cst_10 : f32 to vector<8x1xf32>
      %14 = arith.mulf %12, %13 : vector<8x1xf32>
      %c0_11 = arith.constant 0 : index
      %c0_12 = arith.constant 0 : index
      %15 = vector.load %arg3[%c0_11, %c0_12] : memref<8x1xf32, #tpu.memory_space<vmem>>, vector<8x1xf32>
      tpu.vector_store %arg3[%c0_11, %c0_12], %14 {strides = array<i32>} : memref<8x1xf32, #tpu.memory_space<vmem>>, vector<8x1xf32>,
    } else {
    }
    return
  }
  func.func @transform_0(%arg0: i32, %arg1: i32) -> (i32, i32) {
    %c0_i32 = arith.constant 0 : i32
    return %arg0, %arg1 : i32, i32
  }
  func.func @transform_1(%arg0: i32, %arg1: i32) -> (i32, i32) {
    %c0_i32 = arith.constant 0 : i32
    %c0_i32_0 = arith.constant 0 : i32
    return %arg0, %c0_i32 : i32, i32
  }
}

</mosaic_0001>

<llo_original>
// kernel: tpu_custom_call.1
$region0: #{tpu_custom_call.1}
  #allocation0 [shape = 'u32[]', space=smem, size = 0x4, offset = 0x4, fixed_abs, tag = 'smem constant byte address 0x4 - core index']
  #allocation1 [shape = 'u32[72,128]{1,0:T(1,128)}', space=vmem, size = 0x9000, scoped, tag = 'internal scratch']
  #allocation2 [shape = 'f32[8,1]{1,0:T(8,128)}', space=vmem, size = 0x1000, scoped, tag = 'scratch operand']
  %s0 = inlined_call_operand.hbm [shape: f32[8,256], index: 0, kind: input, shape index: {}]
  %s1 = inlined_call_operand.vmem [shape: f32[8,1], index: 1, kind: output, shape index: {}]
  %s2 = sld [smem:[#allocation0]]
  $region26: #{tpu_custom_call.1} parent=0
    _
  %s4 = ssub.s32 1, %s2
  %s5 = scalar_select 0, %s4, %s2
  $region1: #{tpu_custom_call.1} parent=0
    #allocation3 [shape = 'u8[8192]{0}', space=vmem, size = 0x2000, scoped, tag = 'input window, operand 0, single buffered']
    #allocation4 [shape = 's32[1]{0}', space=sflag, size = 0x4, scoped, tag = 'scoped memory for tpu_custom_call.1']
    %6 = vsyncpa [#allocation4], 0
    // Predicated region
    $region2: #{tpu_custom_call.1} parent=1 // pred_check
      _
    $region3: #{tpu_custom_call.1} parent=1 // pred_check_branch
      %8 = sbr.rel (0) target = $region5
    $region4: #{tpu_custom_call.1} parent=1 // pred_region
      %10 = vsyncadd [#allocation4], 0
      %s12 = sshll.u32 %s0, 4
      %s13 = int_to_ptr.hbm [resolvable:$true] %s12
      %s14 = sshll.u32 [#allocation3], 4
      %s15 = int_to_ptr.vmem [resolvable:$true] %s14
      %17 = dma.hbm_to_vmem [thread:$0]  %s13, 256, %s15, [#allocation4]
    $region5: #{tpu_custom_call.1} parent=1 // pred_fallthru
      _
    // Predicated region
    $region6: #{tpu_custom_call.1} parent=1 // pred_check
      _
    $region7: #{tpu_custom_call.1} parent=1 // pred_check_branch
      %19 = sbr.rel (0) target = $region9
    $region8: #{tpu_custom_call.1} parent=1 // pred_region
      %21 = dma.done [#allocation4], 256
    $region9: #{tpu_custom_call.1} parent=1 // pred_fallthru
      _
    %p22 = scmp.eq.s32.totalorder 0, 0
    // Predicated region
    $region10: #{tpu_custom_call.1} parent=1 // pred_check
      %p23 = pneg %p22
    $region11: #{tpu_custom_call.1} parent=1 // pred_check_branch
      %25 = sbr.rel (%p23) target = $region13
    $region12: #{tpu_custom_call.1} parent=1 // pred_region
      %vm26 = vcmask 7168
      %27 = vst.msk [vmem:[#allocation2] sm:$0xff] %vm26, 0.0
    $region13: #{tpu_custom_call.1} parent=1 // pred_fallthru
      _
    %v28 = vld [vmem:[#allocation3] sm:$0xff]
    %v29 = vld [vmem:[#allocation3 + $0x8] sm:$0xff]
    %v30 = vld [vmem:[#allocation2] sm:$0xff]
    %v31 = vadd.f32 %v28, %v29
    %32 = vadd.xlane.f32.xlu0 %v31
    %v33 = vpop.xlane.xlu0 %32
    %v34 = vadd.f32 %v30, %v33
    %vm35 = vcmask 7168
    %36 = vst.msk [vmem:[#allocation2] sm:$0xff] %vm35, %v34
    // Predicated region
    $region14: #{tpu_custom_call.1} parent=1 // pred_check
      %p37 = pneg %p22
    $region15: #{tpu_custom_call.1} parent=1 // pred_check_branch
      %39 = sbr.rel (%p37) target = $region17
    $region16: #{tpu_custom_call.1} parent=1 // pred_region
      %v40 = vld [vmem:[#allocation2] sm:$0xff]
      %v41 = vmul.f32 %v40, 0.00390625
      %42 = vst.msk [vmem:[%s1] sm:$0xff] %vm35, %v41
    $region17: #{tpu_custom_call.1} parent=1 // pred_fallthru
      _
    // Predicated region
    $region18: #{tpu_custom_call.1} parent=1 // pred_check
      _
    $region19: #{tpu_custom_call.1} parent=1 // pred_check_branch
      %44 = sbr.rel (0) target = $region21
    $region20: #{tpu_custom_call.1} parent=1 // pred_region
      _
    $region21: #{tpu_custom_call.1} parent=1 // pred_fallthru
      _
    // Predicated region
    $region22: #{tpu_custom_call.1} parent=1 // pred_check
      _
    $region23: #{tpu_custom_call.1} parent=1 // pred_check_branch
      %46 = sbr.rel (0) target = $region25
    $region24: #{tpu_custom_call.1} parent=1 // pred_region
      _
    $region25: #{tpu_custom_call.1} parent=1 // pred_fallthru
      _
    %47 = vsyncpa [#allocation4], 1

</llo_original>
